<compile_context>
chip_gen: v7x
topology: tpu7x:2x2x1
jax: 0.10.0
libtpu: 0.0.40
codegen_flags: <defaults>
</compile_context>

<pallas_src>
import functools

import jax
import jax.numpy as jnp
from jax.experimental import pallas as pl
from jax.experimental.pallas import tpu as pltpu

BN_EPS = 1e-5
_LANE = 128
_NEG_INF = -1e30
_XL_RESIDENT_BYTES = 12 * 1024 * 1024   # keep xl VMEM-resident below this


def _round_up(x, m):
    return (x + m - 1) // m * m


def _choose_tiles(n, f_max_p):
    """Padded node count and (row-tile, reduction-tile) sizes.

    Bigger row tiles amortize the ~0.35us per-grid-step overhead; narrow
    feature dims (f_p <= 256) allow larger tiles within the VMEM budget.
    TODO(synk): keep n_pad // tm even for v7x's two TensorCores.
    """
    if n <= 1024:
        n_pad = _round_up(n, 16)            # bf16 sublane packing
        return n_pad, n_pad, n_pad
    tm = 1024 if f_max_p <= 256 else 512
    tk = 512
    n_pad = _round_up(n, max(tm, tk))
    return n_pad, tm, tk


def _agg_vmem_limit(tm, tk, n_pad, f_p, xl_resident):
    """Estimate the aggregation-kernel VMEM footprint and pick a scoped limit
    that is >= every generation's default but < v7x's 64 MiB/TC physical."""
    a_b = 2 * tm * tk * 2                                  # A tile, x2 buffers
    xl_b = n_pad * f_p * 2 if xl_resident else 2 * tk * f_p * 2
    xrb_b = 2 * tm * f_p * 4
    deg_b = 2 * tm * 4
    out_b = 2 * tm * f_p * 4 * 2                           # outputs (f32 worst case)
    acc_b = tm * f_p * 4
    est = a_b + xl_b + xrb_b + deg_b + out_b + acc_b
    return int(min(max(2 * est, 32 * 1024 * 1024), 48 * 1024 * 1024))


# ---------------------------------------------------------------------------
# Pallas kernels
# ---------------------------------------------------------------------------
def _proj_kernel(x_ref, scale_ref, shift_ref, wcat_ref, b_ref, xl_ref, xrb_ref):
    """Fused (previous-layer BatchNorm) + projection.

    x_norm = x * scale + shift  (scale=1, shift=0 for the first layer)
    xw     = x_norm @ [W_l | W_r]
    xl     = neighbor-side projection (bf16 operand of the aggregation matmul)
    xrb    = root-side projection + bias (f32)
    """
    x = (x_ref[...].astype(jnp.float32) * scale_ref[...]
         + shift_ref[...]).astype(jnp.bfloat16)
    xw = jnp.dot(x, wcat_ref[...], preferred_element_type=jnp.float32)
    f = xl_ref.shape[1]
    xl_ref[...] = xw[:, :f].astype(jnp.bfloat16)
    xrb_ref[...] = xw[:, f:] + b_ref[...]


def _agg_hidden_kernel(n_valid, tk, xl_resident,
                       a_ref, xl_ref, xrb_ref, deg_ref, h_ref, stats_ref,
                       acc_ref):
    """h = deg_inv * (A01 @ xl) + xrb (tiled reduction) + BN partial sums.

    Keeps a small f32 accumulator scratch because the HBM output is bf16.
    program_id is hoisted to the top (not supported inside pl.when bodies on
    every lowering path).
    """
    i = pl.program_id(0)
    k = pl.program_id(1)

    @pl.when(k == 0)
    def _():
        acc_ref[...] = jnp.zeros(acc_ref.shape, acc_ref.dtype)

    xl = xl_ref[pl.ds(k * tk, tk), :] if xl_resident else xl_ref[...]
    acc_ref[...] += jnp.dot(a_ref[...], xl, preferred_element_type=jnp.float32)

    @pl.when(k == pl.num_programs(1) - 1)
    def _():
        # exact f32 1/deg applied once, after the integer-valued counts summed
        h = deg_ref[...] * acc_ref[...] + xrb_ref[...]
        h_ref[...] = h.astype(h_ref.dtype)
        # Partial BatchNorm statistics for this row tile.  Padded rows carry
        # the bias from xrb -> they MUST stay masked out of the statistics
        # (A01's zero columns already keep them from feeding valid rows).
        row = i * h.shape[0] + jax.lax.broadcasted_iota(jnp.int32, h.shape, 0)
        hm = jnp.where(row < n_valid, h, 0.0)
        stats_ref[0, 0:1, :] = jnp.sum(hm, axis=0, keepdims=True)
        stats_ref[0, 1:2, :] = jnp.sum(hm * hm, axis=0, keepdims=True)


def _agg_final_kernel(n_classes, tk, xl_resident,
                      a_ref, xl_ref, xrb_ref, deg_ref, out_ref, emb_ref):
    """Final layer: emb = deg_inv * (A01 @ xl) + xrb, out = log_softmax(emb).

    Accumulates directly into the VMEM-resident f32 output block (its block
    index is constant across the reduction axis), so no scratch is needed.
    Padded lanes of `out` hold ~-1e30 - lse and are sliced off by the wrapper.
    """
    k = pl.program_id(1)

    @pl.when(k == 0)
    def _():
        emb_ref[...] = jnp.zeros(emb_ref.shape, emb_ref.dtype)

    xl = xl_ref[pl.ds(k * tk, tk), :] if xl_resident else xl_ref[...]
    emb_ref[...] += jnp.dot(a_ref[...], xl, preferred_element_type=jnp.float32)

    @pl.when(k == pl.num_programs(1) - 1)
    def _():
        h = deg_ref[...] * emb_ref[...] + xrb_ref[...]
        emb_ref[...] = h
        col = jax.lax.broadcasted_iota(jnp.int32, h.shape, 1)
        hm = jnp.where(col < n_classes, h, _NEG_INF)
        m = jnp.max(hm, axis=1, keepdims=True)
        lse = m + jnp.log(jnp.sum(jnp.exp(hm - m), axis=1, keepdims=True))
        out_ref[...] = hm - lse


# ---------------------------------------------------------------------------
# pallas_call wrappers
# ---------------------------------------------------------------------------
def _project(h, scale, shift, wcat, b_pad, tm):
    n_pad, f_in_p = h.shape
    f_out_p = b_pad.shape[1]
    return pl.pallas_call(
        _proj_kernel,
        out_shape=(jax.ShapeDtypeStruct((n_pad, f_out_p), jnp.bfloat16),
                   jax.ShapeDtypeStruct((n_pad, f_out_p), jnp.float32)),
        grid=(n_pad // tm,),
        in_specs=[pl.BlockSpec((tm, f_in_p), lambda i: (i, 0)),
                  pl.BlockSpec((1, f_in_p), lambda i: (0, 0)),
                  pl.BlockSpec((1, f_in_p), lambda i: (0, 0)),
                  pl.BlockSpec((f_in_p, 2 * f_out_p), lambda i: (0, 0)),
                  pl.BlockSpec((1, f_out_p), lambda i: (0, 0))],
        out_specs=(pl.BlockSpec((tm, f_out_p), lambda i: (i, 0)),
                   pl.BlockSpec((tm, f_out_p), lambda i: (i, 0))),
        compiler_params=pltpu.CompilerParams(
            dimension_semantics=("parallel",)),
    )(h, scale, shift, wcat, b_pad)


def _aggregate_hidden(a01, xl, xrb, deg_inv, n_valid, tm, tk, xl_resident,
                      vmem_limit):
    n_pad, f_p = xrb.shape
    n_rt, n_kt = n_pad // tm, n_pad // tk
    xl_spec = (pl.BlockSpec((n_pad, f_p), lambda i, k: (0, 0)) if xl_resident
               else pl.BlockSpec((tk, f_p), lambda i, k: (k, 0)))
    return pl.pallas_call(
        functools.partial(_agg_hidden_kernel, n_valid, tk, xl_resident),
        out_shape=(jax.ShapeDtypeStruct((n_pad, f_p), jnp.bfloat16),
                   jax.ShapeDtypeStruct((n_rt, 2, f_p), jnp.float32)),
        grid=(n_rt, n_kt),
        in_specs=[pl.BlockSpec((tm, tk), lambda i, k: (i, k)),
                  xl_spec,
                  pl.BlockSpec((tm, f_p), lambda i, k: (i, 0)),
                  pl.BlockSpec((tm, 1), lambda i, k: (i, 0))],
        out_specs=(pl.BlockSpec((tm, f_p), lambda i, k: (i, 0)),
                   pl.BlockSpec((1, 2, f_p), lambda i, k: (i, 0, 0))),
        scratch_shapes=[pltpu.VMEM((tm, f_p), jnp.float32)],
        compiler_params=pltpu.CompilerParams(
            dimension_semantics=("parallel", "arbitrary"),
            vmem_limit_bytes=vmem_limit),
    )(a01, xl, xrb, deg_inv)


def _aggregate_final(a01, xl, xrb, deg_inv, n_classes, tm, tk, xl_resident,
                     vmem_limit):
    n_pad, f_p = xrb.shape
    n_rt, n_kt = n_pad // tm, n_pad // tk
    xl_spec = (pl.BlockSpec((n_pad, f_p), lambda i, k: (0, 0)) if xl_resident
               else pl.BlockSpec((tk, f_p), lambda i, k: (k, 0)))
    return pl.pallas_call(
        functools.partial(_agg_final_kernel, n_classes, tk, xl_resident),
        out_shape=(jax.ShapeDtypeStruct((n_pad, f_p), jnp.float32),
                   jax.ShapeDtypeStruct((n_pad, f_p), jnp.float32)),
        grid=(n_rt, n_kt),
        in_specs=[pl.BlockSpec((tm, tk), lambda i, k: (i, k)),
                  xl_spec,
                  pl.BlockSpec((tm, f_p), lambda i, k: (i, 0)),
                  pl.BlockSpec((tm, 1), lambda i, k: (i, 0))],
        out_specs=(pl.BlockSpec((tm, f_p), lambda i, k: (i, 0)),
                   pl.BlockSpec((tm, f_p), lambda i, k: (i, 0))),
        compiler_params=pltpu.CompilerParams(
            dimension_semantics=("parallel", "arbitrary"),
            vmem_limit_bytes=vmem_limit),
    )(a01, xl, xrb, deg_inv)


def _bn_scale_shift(stats, gamma_pad, beta_pad, n_valid):
    """Finalize BatchNorm into a (scale, shift) pair (tiny plain-JAX math).
    Padded feature lanes have gamma=0 -> scale=0, shift=0 -> they stay zero."""
    s = jnp.sum(stats, axis=0)                          # (2, F): sum, sumsq
    mean = s[0:1, :] * (1.0 / n_valid)
    var = jnp.maximum(s[1:2, :] * (1.0 / n_valid) - mean * mean, 0.0)
    scale = gamma_pad * jax.lax.rsqrt(var + BN_EPS)
    shift = beta_pad - mean * scale
    return scale, shift


# ---------------------------------------------------------------------------
# Model: parameter init + adjacency + forward
# ---------------------------------------------------------------------------
def init_params(key, num_layers, hidden_unit, input_dim, output_dim):
    dims = [input_dim] + [hidden_unit] * (num_layers - 1) + [output_dim]
    params = []
    for i in range(num_layers):
        f_in, f_out = dims[i], dims[i + 1]
        key, k1, k2 = jax.random.split(key, 3)
        layer = {
            "w_l": jax.random.normal(k1, (f_in, f_out), jnp.float32) * 0.1,
            "w_r": jax.random.normal(k2, (f_in, f_out), jnp.float32) * 0.1,
            "b": jnp.zeros((1, f_out), jnp.float32),
        }
        if i < num_layers - 1:  # BatchNorm1d after every layer but the last
            layer["gamma"] = jnp.ones((1, f_out), jnp.float32)
            layer["beta"] = jnp.zeros((1, f_out), jnp.float32)
        params.append(layer)
    return params


def build_graph_operands(edge_index, n_pad):
    """Build, ONCE (outside the per-forward jit), the padded 0/1 edge-count
    adjacency (exact in bf16) and the exact f32 per-row 1/deg vector.
    A[i, j] = #edges j->i; rows with no incoming edges get deg_inv=1 -> 0."""
    src, dst = edge_index[0], edge_index[1]
    counts = jnp.zeros((n_pad, n_pad), jnp.float32).at[dst, src].add(1.0)
    deg = jnp.sum(counts, axis=1, keepdims=True)
    deg_inv = 1.0 / jnp.maximum(deg, 1.0)
    return counts.astype(jnp.bfloat16), deg_inv


@functools.partial(jax.jit, static_argnames=("tm", "tk"))
def graphsage2_forward(params, x, a01_pad, deg_inv_pad, *, tm, tk):
    n, f_in = x.shape
    n_pad = a01_pad.shape[0]
    num_layers = len(params)
    out_dim = params[-1]["w_l"].shape[1]

    # node features are carried in bf16 (the MXU operand dtype) between layers
    f_in_p = _round_up(f_in, _LANE)
    h = jnp.pad(x, ((0, n_pad - n), (0, f_in_p - f_in))).astype(jnp.bfloat16)

    # identity normalization for the first layer (BN of layer l is fused into
    # the projection of layer l+1 as a scale/shift)
    scale = jnp.ones((1, f_in_p), jnp.float32)
    shift = jnp.zeros((1, f_in_p), jnp.float32)

    out_p = emb_p = None
    for i, p in enumerate(params):
        w_l, w_r, b = p["w_l"], p["w_r"], p["b"]
        fi, fo = w_l.shape
        fi_p, fo_p = _round_up(fi, _LANE), _round_up(fo, _LANE)
        wcat = jnp.concatenate(
            [jnp.pad(w_l, ((0, fi_p - fi), (0, fo_p - fo))),
             jnp.pad(w_r, ((0, fi_p - fi), (0, fo_p - fo)))],
            axis=1).astype(jnp.bfloat16)
        b_pad = jnp.pad(b, ((0, 0), (0, fo_p - fo)))

        xl, xrb = _project(h, scale, shift, wcat, b_pad, tm)

        xl_resident = n_pad * fo_p * 2 <= _XL_RESIDENT_BYTES
        vmem_limit = _agg_vmem_limit(tm, tk, n_pad, fo_p, xl_resident)

        if i < num_layers - 1:
            h, stats = _aggregate_hidden(a01_pad, xl, xrb, deg_inv_pad,
                                         n, tm, tk, xl_resident, vmem_limit)
            gamma_pad = jnp.pad(p["gamma"], ((0, 0), (0, fo_p - fo)))
            beta_pad = jnp.pad(p["beta"], ((0, 0), (0, fo_p - fo)))
            scale, shift = _bn_scale_shift(stats, gamma_pad, beta_pad, n)
        else:
            out_p, emb_p = _aggregate_final(a01_pad, xl, xrb, deg_inv_pad,
                                            out_dim, tm, tk, xl_resident,
                                            vmem_limit)

    # dropout_rate is unused in the reference forward() (no F.dropout call).
    return {"out": out_p[:n, :out_dim], "emb": emb_p[:n, :out_dim]}


def graphsage2_reference(params, x, a_mean):
    """Pure-JAX f32 reference for correctness checking."""
    h = x
    num_layers = len(params)
    for i, p in enumerate(params):
        z = (a_mean @ h) @ p["w_l"] + h @ p["w_r"] + p["b"]
        if i < num_layers - 1:
            mean = jnp.mean(z, axis=0, keepdims=True)
            var = jnp.mean((z - mean) ** 2, axis=0, keepdims=True)
            h = p["gamma"] * (z - mean) * jax.lax.rsqrt(var + BN_EPS) + p["beta"]
        else:
            out = z - jax.scipy.special.logsumexp(z, axis=1, keepdims=True)
            return {"out": out, "emb": z}


if __name__ == "__main__":
    key = jax.random.PRNGKey(0)

    num_nodes, input_dim, hidden_unit, output_dim = 16, 8, 32, 4
    num_layers, num_edges = 3, 48
    dropout_rate = 0.5  # unused in forward, kept for interface parity

    key, kx, ks, kd, kp = jax.random.split(key, 5)
    x = jax.random.normal(kx, (num_nodes, input_dim), jnp.float32)
    edge_index = jnp.stack([
        jax.random.randint(ks, (num_edges,), 0, num_nodes),
        jax.random.randint(kd, (num_edges,), 0, num_nodes),
    ], axis=0)

    params = init_params(kp, num_layers, hidden_unit, input_dim, output_dim)

    f_max_p = max(_round_up(d, _LANE)
                  for d in (input_dim, hidden_unit, output_dim))
    n_pad, tm, tk = _choose_tiles(num_nodes, f_max_p)

    # graph operands built once, outside the per-forward jitted function
    a01_pad, deg_inv_pad = build_graph_operands(edge_index, n_pad)

    result = graphsage2_forward(params, x, a01_pad, deg_inv_pad, tm=tm, tk=tk)
    jax.block_until_ready(result)

    assert result["out"].shape == (num_nodes, output_dim)
    assert result["emb"].shape == (num_nodes, output_dim)

    # log_softmax rows exponentiate-sum to 1
    row_sums = jnp.sum(jnp.exp(result["out"]), axis=1)
    assert bool(jnp.all(jnp.abs(row_sums - 1.0) < 1e-3))

    # bf16 MXU operands / bf16 intermediates + f32 accumulation: compare
    # against the f32 reference with a bf16-appropriate tolerance.
    a_mean = (a01_pad.astype(jnp.float32)
              * deg_inv_pad)[:num_nodes, :num_nodes]
    ref = graphsage2_reference(params, x, a_mean)
    assert bool(jnp.max(jnp.abs(result["out"] - ref["out"])) < 1e-1)
    assert bool(jnp.max(jnp.abs(result["emb"] - ref["emb"])) < 1e-1)

    print("KERNEL_OK")
</pallas_src>

<mosaic_0001>
module attributes {stable_mosaic.version = 11 : i64} {
  func.func @_proj_kernel(%arg0: i32, %arg1: memref<16x128xbf16, #tpu.memory_space<vmem>>, %arg2: memref<1x128xf32, #tpu.memory_space<vmem>>, %arg3: memref<1x128xf32, #tpu.memory_space<vmem>>, %arg4: memref<128x256xbf16, #tpu.memory_space<vmem>>, %arg5: memref<1x128xf32, #tpu.memory_space<vmem>>, %arg6: memref<16x128xbf16, #tpu.memory_space<vmem>>, %arg7: memref<16x128xf32, #tpu.memory_space<vmem>>) attributes {dimension_semantics = [#tpu.dimension_semantics<parallel>], iteration_bounds = array<i64: 1>, scalar_prefetch = 0 : i64, scratch_operands = 0 : i64, tpu.core_type = #tpu.core_type<tc>, window_params = [{transform_indices = @transform_0, window_bounds = array<i64: 16, 128>}, {pipeline_mode = #tpu.pipeline_mode<synchronous>, transform_indices = @transform_1, window_bounds = array<i64: 1, 128>}, {pipeline_mode = #tpu.pipeline_mode<synchronous>, transform_indices = @transform_2, window_bounds = array<i64: 1, 128>}, {pipeline_mode = #tpu.pipeline_mode<synchronous>, transform_indices = @transform_3, window_bounds = array<i64: 128, 256>}, {pipeline_mode = #tpu.pipeline_mode<synchronous>, transform_indices = @transform_4, window_bounds = array<i64: 1, 128>}, {transform_indices = @transform_5, window_bounds = array<i64: 16, 128>}, {transform_indices = @transform_6, window_bounds = array<i64: 16, 128>}]} {
    %c0 = arith.constant 0 : index
    %c0_0 = arith.constant 0 : index
    %0 = vector.load %arg1[%c0, %c0_0] : memref<16x128xbf16, #tpu.memory_space<vmem>>, vector<16x128xbf16>
    %1 = arith.extf %0 : vector<16x128xbf16> to vector<16x128xf32>
    %c0_1 = arith.constant 0 : index
    %c0_2 = arith.constant 0 : index
    %2 = vector.load %arg2[%c0_1, %c0_2] : memref<1x128xf32, #tpu.memory_space<vmem>>, vector<1x128xf32>
    %3 = vector.broadcast %2 : vector<1x128xf32> to vector<16x128xf32>
    %4 = arith.mulf %1, %3 : vector<16x128xf32>
    %c0_3 = arith.constant 0 : index
    %c0_4 = arith.constant 0 : index
    %5 = vector.load %arg3[%c0_3, %c0_4] : memref<1x128xf32, #tpu.memory_space<vmem>>, vector<1x128xf32>
    %6 = vector.broadcast %5 : vector<1x128xf32> to vector<16x128xf32>
    %7 = arith.addf %4, %6 : vector<16x128xf32>
    %8 = arith.truncf %7 : vector<16x128xf32> to vector<16x128xbf16>
    %c0_5 = arith.constant 0 : index
    %c0_6 = arith.constant 0 : index
    %9 = vector.load %arg4[%c0_5, %c0_6] : memref<128x256xbf16, #tpu.memory_space<vmem>>, vector<128x256xbf16>
    %cst = arith.constant dense<0.000000e+00> : vector<16x256xf32>
    %10 = tpu.matmul %8, %9, %cst {dimension_numbers = #tpu.dot_dimension_numbers<[1], [0], [0], [1], [0, 0, 1, 1], [], []>} : vector<16x128xbf16>, vector<128x256xbf16>, vector<16x256xf32> -> vector<16x256xf32>
    %11 = vector.extract_strided_slice %10 {offsets = [0, 0], sizes = [16, 128], strides = [1, 1]} : vector<16x256xf32> to vector<16x128xf32>
    %12 = arith.truncf %11 : vector<16x128xf32> to vector<16x128xbf16>
    %c0_7 = arith.constant 0 : index
    %c0_8 = arith.constant 0 : index
    %13 = vector.load %arg6[%c0_7, %c0_8] : memref<16x128xbf16, #tpu.memory_space<vmem>>, vector<16x128xbf16>
    tpu.vector_store %arg6[%c0_7, %c0_8], %12 {strides = array<i32>} : memref<16x128xbf16, #tpu.memory_space<vmem>>, vector<16x128xbf16>,
    %14 = vector.extract_strided_slice %10 {offsets = [0, 128], sizes = [16, 128], strides = [1, 1]} : vector<16x256xf32> to vector<16x128xf32>
    %c0_9 = arith.constant 0 : index
    %c0_10 = arith.constant 0 : index
    %15 = vector.load %arg5[%c0_9, %c0_10] : memref<1x128xf32, #tpu.memory_space<vmem>>, vector<1x128xf32>
    %16 = vector.broadcast %15 : vector<1x128xf32> to vector<16x128xf32>
    %17 = arith.addf %14, %16 : vector<16x128xf32>
    %c0_11 = arith.constant 0 : index
    %c0_12 = arith.constant 0 : index
    %18 = vector.load %arg7[%c0_11, %c0_12] : memref<16x128xf32, #tpu.memory_space<vmem>>, vector<16x128xf32>
    tpu.vector_store %arg7[%c0_11, %c0_12], %17 {strides = array<i32>} : memref<16x128xf32, #tpu.memory_space<vmem>>, vector<16x128xf32>,
    return
  }
  func.func @transform_0(%arg0: i32) -> (i32, i32) {
    %c0_i32 = arith.constant 0 : i32
    %c0_i32_0 = arith.constant 0 : i32
    return %arg0, %c0_i32 : i32, i32
  }
  func.func @transform_1(%arg0: i32) -> (i32, i32) {
    %c0_i32 = arith.constant 0 : i32
    %c0_i32_0 = arith.constant 0 : i32
    %c0_i32_1 = arith.constant 0 : i32
    return %c0_i32, %c0_i32_0 : i32, i32
  }
  func.func @transform_2(%arg0: i32) -> (i32, i32) {
    %c0_i32 = arith.constant 0 : i32
    %c0_i32_0 = arith.constant 0 : i32
    %c0_i32_1 = arith.constant 0 : i32
    return %c0_i32, %c0_i32_0 : i32, i32
  }
  func.func @transform_3(%arg0: i32) -> (i32, i32) {
    %c0_i32 = arith.constant 0 : i32
    %c0_i32_0 = arith.constant 0 : i32
    %c0_i32_1 = arith.constant 0 : i32
    return %c0_i32, %c0_i32_0 : i32, i32
  }
  func.func @transform_4(%arg0: i32) -> (i32, i32) {
    %c0_i32 = arith.constant 0 : i32
    %c0_i32_0 = arith.constant 0 : i32
    %c0_i32_1 = arith.constant 0 : i32
    return %c0_i32, %c0_i32_0 : i32, i32
  }
  func.func @transform_5(%arg0: i32) -> (i32, i32) {
    %c0_i32 = arith.constant 0 : i32
    %c0_i32_0 = arith.constant 0 : i32
    return %arg0, %c0_i32 : i32, i32
  }
  func.func @transform_6(%arg0: i32) -> (i32, i32) {
    %c0_i32 = arith.constant 0 : i32
    %c0_i32_0 = arith.constant 0 : i32
    return %arg0, %c0_i32 : i32, i32
  }
}

module attributes {stable_mosaic.version = 11 : i64} {
  func.func @_agg_hidden_kernel(%arg0: i32, %arg1: i32, %arg2: memref<16x16xbf16, #tpu.memory_space<vmem>>, %arg3: memref<16x128xbf16, #tpu.memory_space<vmem>>, %arg4: memref<16x128xf32, #tpu.memory_space<vmem>>, %arg5: memref<16x1xf32, #tpu.memory_space<vmem>>, %arg6: memref<16x128xbf16, #tpu.memory_space<vmem>>, %arg7: memref<1x2x128xf32, #tpu.memory_space<vmem>>, %arg8: memref<16x128xf32, #tpu.memory_space<vmem>>) attributes {dimension_semantics = [#tpu.dimension_semantics<parallel>, #tpu.dimension_semantics<arbitrary>], iteration_bounds = array<i64: 1, 1>, scalar_prefetch = 0 : i64, scratch_operands = 1 : i64, tpu.core_type = #tpu.core_type<tc>, window_params = [{transform_indices = @transform_0, window_bounds = array<i64: 16, 16>}, {pipeline_mode = #tpu.pipeline_mode<synchronous>, transform_indices = @transform_1, window_bounds = array<i64: 16, 128>}, {transform_indices = @transform_2, window_bounds = array<i64: 16, 128>}, {transform_indices = @transform_3, window_bounds = array<i64: 16, 1>}, {transform_indices = @transform_4, window_bounds = array<i64: 16, 128>}, {transform_indices = @transform_5, window_bounds = array<i64: 1, 2, 128>}]} {
    %c0_i32 = arith.constant 0 : i32
    %0 = arith.cmpi eq, %arg1, %c0_i32 : i32
    %1 = arith.extui %0 : i1 to i32
    %c0_i32_0 = arith.constant 0 : i32
    %2 = arith.cmpi ne, %1, %c0_i32_0 : i32
    scf.if %2 {
      %cst_9 = arith.constant 0.000000e+00 : f32
      %14 = vector.broadcast %cst_9 : f32 to vector<16x128xf32>
      %c0_10 = arith.constant 0 : index
      %c0_11 = arith.constant 0 : index
      %15 = vector.load %arg8[%c0_10, %c0_11] : memref<16x128xf32, #tpu.memory_space<vmem>>, vector<16x128xf32>
      tpu.vector_store %arg8[%c0_10, %c0_11], %14 {strides = array<i32>} : memref<16x128xf32, #tpu.memory_space<vmem>>, vector<16x128xf32>,
    } else {
    }
    %c16_i32 = arith.constant 16 : i32
    %3 = arith.muli %arg1, %c16_i32 : i32
    %4 = arith.index_cast %3 : i32 to index
    %c0 = arith.constant 0 : index
    %5 = vector.load %arg3[%4, %c0] : memref<16x128xbf16, #tpu.memory_space<vmem>>, vector<16x128xbf16>
    %c0_1 = arith.constant 0 : index
    %c0_2 = arith.constant 0 : index
    %6 = vector.load %arg8[%c0_1, %c0_2] : memref<16x128xf32, #tpu.memory_space<vmem>>, vector<16x128xf32>
    %c0_3 = arith.constant 0 : index
    %c0_4 = arith.constant 0 : index
    %7 = vector.load %arg2[%c0_3, %c0_4] : memref<16x16xbf16, #tpu.memory_space<vmem>>, vector<16x16xbf16>
    %cst = arith.constant dense<0.000000e+00> : vector<16x128xf32>
    %8 = tpu.matmul %7, %5, %cst {dimension_numbers = #tpu.dot_dimension_numbers<[1], [0], [0], [1], [0, 0, 1, 1], [], []>} : vector<16x16xbf16>, vector<16x128xbf16>, vector<16x128xf32> -> vector<16x128xf32>
    %9 = arith.addf %6, %8 : vector<16x128xf32>
    %c0_5 = arith.constant 0 : index
    %c0_6 = arith.constant 0 : index
    %10 = vector.load %arg8[%c0_5, %c0_6] : memref<16x128xf32, #tpu.memory_space<vmem>>, vector<16x128xf32>
    tpu.vector_store %arg8[%c0_5, %c0_6], %9 {strides = array<i32>} : memref<16x128xf32, #tpu.memory_space<vmem>>, vector<16x128xf32>,
    %c0_i32_7 = arith.constant 0 : i32
    %11 = arith.cmpi eq, %arg1, %c0_i32_7 : i32
    %12 = arith.extui %11 : i1 to i32
    %c0_i32_8 = arith.constant 0 : i32
    %13 = arith.cmpi ne, %12, %c0_i32_8 : i32
    scf.if %13 {
      %c0_9 = arith.constant 0 : index
      %c0_10 = arith.constant 0 : index
      %14 = vector.load %arg5[%c0_9, %c0_10] : memref<16x1xf32, #tpu.memory_space<vmem>>, vector<16x1xf32>
      %c0_11 = arith.constant 0 : index
      %c0_12 = arith.constant 0 : index
      %15 = vector.load %arg8[%c0_11, %c0_12] : memref<16x128xf32, #tpu.memory_space<vmem>>, vector<16x128xf32>
      %16 = vector.broadcast %14 : vector<16x1xf32> to vector<16x128xf32>
      %17 = arith.mulf %16, %15 : vector<16x128xf32>
      %c0_13 = arith.constant 0 : index
      %c0_14 = arith.constant 0 : index
      %18 = vector.load %arg4[%c0_13, %c0_14] : memref<16x128xf32, #tpu.memory_space<vmem>>, vector<16x128xf32>
      %19 = arith.addf %17, %18 : vector<16x128xf32>
      %20 = arith.truncf %19 : vector<16x128xf32> to vector<16x128xbf16>
      %c0_15 = arith.constant 0 : index
      %c0_16 = arith.constant 0 : index
      %21 = vector.load %arg6[%c0_15, %c0_16] : memref<16x128xbf16, #tpu.memory_space<vmem>>, vector<16x128xbf16>
      tpu.vector_store %arg6[%c0_15, %c0_16], %20 {strides = array<i32>} : memref<16x128xbf16, #tpu.memory_space<vmem>>, vector<16x128xbf16>,
      %c16_i32_17 = arith.constant 16 : i32
      %22 = arith.muli %arg0, %c16_i32_17 : i32
      %23 = tpu.iota {dimensions = array<i32: 0>} : vector<16x128xi32>
      %24 = vector.broadcast %22 : i32 to vector<16x128xi32>
      %25 = arith.addi %24, %23 : vector<16x128xi32>
      %c16_i32_18 = arith.constant 16 : i32
      %26 = vector.broadcast %c16_i32_18 : i32 to vector<16x128xi32>
      %27 = arith.cmpi slt, %25, %26 : vector<16x128xi32>
      %cst_19 = arith.constant 0.000000e+00 : f32
      %28 = vector.broadcast %cst_19 : f32 to vector<16x128xf32>
      %29 = arith.select %27, %19, %28 : vector<16x128xi1>, vector<16x128xf32>
      %cst_20 = arith.constant dense<0.000000e+00> : vector<128xf32>
      %30 = vector.multi_reduction <add>, %29, %cst_20 [0] : vector<16x128xf32> to vector<128xf32>
      %31 = vector.shape_cast %30 : vector<128xf32> to vector<1x128xf32>
      %c0_21 = arith.constant 0 : index
      %c0_22 = arith.constant 0 : index
      %c0_23 = arith.constant 0 : index
      %32 = vector.load %arg7[%c0_21, %c0_22, %c0_23] : memref<1x2x128xf32, #tpu.memory_space<vmem>>, vector<1x1x128xf32>
      %33 = vector.shape_cast %32 : vector<1x1x128xf32> to vector<1x128xf32>
      %34 = vector.shape_cast %31 : vector<1x128xf32> to vector<1x1x128xf32>
      tpu.vector_store %arg7[%c0_21, %c0_22, %c0_23], %34 {strides = array<i32>} : memref<1x2x128xf32, #tpu.memory_space<vmem>>, vector<1x1x128xf32>,
      %35 = arith.mulf %29, %29 : vector<16x128xf32>
      %cst_24 = arith.constant dense<0.000000e+00> : vector<128xf32>
      %36 = vector.multi_reduction <add>, %35, %cst_24 [0] : vector<16x128xf32> to vector<128xf32>
      %37 = vector.shape_cast %36 : vector<128xf32> to vector<1x128xf32>
      %c0_25 = arith.constant 0 : index
      %c1 = arith.constant 1 : index
      %c0_26 = arith.constant 0 : index
      %38 = vector.load %arg7[%c0_25, %c1, %c0_26] : memref<1x2x128xf32, #tpu.memory_space<vmem>>, vector<1x1x128xf32>
      %39 = vector.shape_cast %38 : vector<1x1x128xf32> to vector<1x128xf32>
      %40 = vector.shape_cast %37 : vector<1x128xf32> to vector<1x1x128xf32>
      tpu.vector_store %arg7[%c0_25, %c1, %c0_26], %40 {strides = array<i32>} : memref<1x2x128xf32, #tpu.memory_space<vmem>>, vector<1x1x128xf32>,
    } else {
    }
    return
  }
  func.func @transform_0(%arg0: i32, %arg1: i32) -> (i32, i32) {
    %c0_i32 = arith.constant 0 : i32
    return %arg0, %arg1 : i32, i32
  }
  func.func @transform_1(%arg0: i32, %arg1: i32) -> (i32, i32) {
    %c0_i32 = arith.constant 0 : i32
    %c0_i32_0 = arith.constant 0 : i32
    %c0_i32_1 = arith.constant 0 : i32
    return %c0_i32, %c0_i32_0 : i32, i32
  }
  func.func @transform_2(%arg0: i32, %arg1: i32) -> (i32, i32) {
    %c0_i32 = arith.constant 0 : i32
    %c0_i32_0 = arith.constant 0 : i32
    return %arg0, %c0_i32 : i32, i32
  }
  func.func @transform_3(%arg0: i32, %arg1: i32) -> (i32, i32) {
    %c0_i32 = arith.constant 0 : i32
    %c0_i32_0 = arith.constant 0 : i32
    return %arg0, %c0_i32 : i32, i32
  }
  func.func @transform_4(%arg0: i32, %arg1: i32) -> (i32, i32) {
    %c0_i32 = arith.constant 0 : i32
    %c0_i32_0 = arith.constant 0 : i32
    return %arg0, %c0_i32 : i32, i32
  }
  func.func @transform_5(%arg0: i32, %arg1: i32) -> (i32, i32, i32) {
    %c0_i32 = arith.constant 0 : i32
    %c0_i32_0 = arith.constant 0 : i32
    %c0_i32_1 = arith.constant 0 : i32
    return %arg0, %c0_i32, %c0_i32_0 : i32, i32, i32
  }
}

module attributes {stable_mosaic.version = 11 : i64} {
  func.func @_agg_final_kernel(%arg0: i32, %arg1: i32, %arg2: memref<16x16xbf16, #tpu.memory_space<vmem>>, %arg3: memref<16x128xbf16, #tpu.memory_space<vmem>>, %arg4: memref<16x128xf32, #tpu.memory_space<vmem>>, %arg5: memref<16x1xf32, #tpu.memory_space<vmem>>, %arg6: memref<16x128xf32, #tpu.memory_space<vmem>>, %arg7: memref<16x128xf32, #tpu.memory_space<vmem>>) attributes {dimension_semantics = [#tpu.dimension_semantics<parallel>, #tpu.dimension_semantics<arbitrary>], iteration_bounds = array<i64: 1, 1>, scalar_prefetch = 0 : i64, scratch_operands = 0 : i64, tpu.core_type = #tpu.core_type<tc>, window_params = [{transform_indices = @transform_0, window_bounds = array<i64: 16, 16>}, {pipeline_mode = #tpu.pipeline_mode<synchronous>, transform_indices = @transform_1, window_bounds = array<i64: 16, 128>}, {transform_indices = @transform_2, window_bounds = array<i64: 16, 128>}, {transform_indices = @transform_3, window_bounds = array<i64: 16, 1>}, {transform_indices = @transform_4, window_bounds = array<i64: 16, 128>}, {transform_indices = @transform_5, window_bounds = array<i64: 16, 128>}]} {
    %c0_i32 = arith.constant 0 : i32
    %0 = arith.cmpi eq, %arg1, %c0_i32 : i32
    %1 = arith.extui %0 : i1 to i32
    %c0_i32_0 = arith.constant 0 : i32
    %2 = arith.cmpi ne, %1, %c0_i32_0 : i32
    scf.if %2 {
      %cst_9 = arith.constant 0.000000e+00 : f32
      %14 = vector.broadcast %cst_9 : f32 to vector<16x128xf32>
      %c0_10 = arith.constant 0 : index
      %c0_11 = arith.constant 0 : index
      %15 = vector.load %arg7[%c0_10, %c0_11] : memref<16x128xf32, #tpu.memory_space<vmem>>, vector<16x128xf32>
      tpu.vector_store %arg7[%c0_10, %c0_11], %14 {strides = array<i32>} : memref<16x128xf32, #tpu.memory_space<vmem>>, vector<16x128xf32>,
    } else {
    }
    %c16_i32 = arith.constant 16 : i32
    %3 = arith.muli %arg1, %c16_i32 : i32
    %4 = arith.index_cast %3 : i32 to index
    %c0 = arith.constant 0 : index
    %5 = vector.load %arg3[%4, %c0] : memref<16x128xbf16, #tpu.memory_space<vmem>>, vector<16x128xbf16>
    %c0_1 = arith.constant 0 : index
    %c0_2 = arith.constant 0 : index
    %6 = vector.load %arg7[%c0_1, %c0_2] : memref<16x128xf32, #tpu.memory_space<vmem>>, vector<16x128xf32>
    %c0_3 = arith.constant 0 : index
    %c0_4 = arith.constant 0 : index
    %7 = vector.load %arg2[%c0_3, %c0_4] : memref<16x16xbf16, #tpu.memory_space<vmem>>, vector<16x16xbf16>
    %cst = arith.constant dense<0.000000e+00> : vector<16x128xf32>
    %8 = tpu.matmul %7, %5, %cst {dimension_numbers = #tpu.dot_dimension_numbers<[1], [0], [0], [1], [0, 0, 1, 1], [], []>} : vector<16x16xbf16>, vector<16x128xbf16>, vector<16x128xf32> -> vector<16x128xf32>
    %9 = arith.addf %6, %8 : vector<16x128xf32>
    %c0_5 = arith.constant 0 : index
    %c0_6 = arith.constant 0 : index
    %10 = vector.load %arg7[%c0_5, %c0_6] : memref<16x128xf32, #tpu.memory_space<vmem>>, vector<16x128xf32>
    tpu.vector_store %arg7[%c0_5, %c0_6], %9 {strides = array<i32>} : memref<16x128xf32, #tpu.memory_space<vmem>>, vector<16x128xf32>,
    %c0_i32_7 = arith.constant 0 : i32
    %11 = arith.cmpi eq, %arg1, %c0_i32_7 : i32
    %12 = arith.extui %11 : i1 to i32
    %c0_i32_8 = arith.constant 0 : i32
    %13 = arith.cmpi ne, %12, %c0_i32_8 : i32
    scf.if %13 {
      %c0_9 = arith.constant 0 : index
      %c0_10 = arith.constant 0 : index
      %14 = vector.load %arg5[%c0_9, %c0_10] : memref<16x1xf32, #tpu.memory_space<vmem>>, vector<16x1xf32>
      %c0_11 = arith.constant 0 : index
      %c0_12 = arith.constant 0 : index
      %15 = vector.load %arg7[%c0_11, %c0_12] : memref<16x128xf32, #tpu.memory_space<vmem>>, vector<16x128xf32>
      %16 = vector.broadcast %14 : vector<16x1xf32> to vector<16x128xf32>
      %17 = arith.mulf %16, %15 : vector<16x128xf32>
      %c0_13 = arith.constant 0 : index
      %c0_14 = arith.constant 0 : index
      %18 = vector.load %arg4[%c0_13, %c0_14] : memref<16x128xf32, #tpu.memory_space<vmem>>, vector<16x128xf32>
      %19 = arith.addf %17, %18 : vector<16x128xf32>
      %c0_15 = arith.constant 0 : index
      %c0_16 = arith.constant 0 : index
      %20 = vector.load %arg7[%c0_15, %c0_16] : memref<16x128xf32, #tpu.memory_space<vmem>>, vector<16x128xf32>
      tpu.vector_store %arg7[%c0_15, %c0_16], %19 {strides = array<i32>} : memref<16x128xf32, #tpu.memory_space<vmem>>, vector<16x128xf32>,
      %21 = tpu.iota {dimensions = array<i32: 1>} : vector<16x128xi32>
      %c4_i32 = arith.constant 4 : i32
      %22 = vector.broadcast %c4_i32 : i32 to vector<16x128xi32>
      %23 = arith.cmpi slt, %21, %22 : vector<16x128xi32>
      %cst_17 = arith.constant -1.000000e+30 : f32
      %24 = vector.broadcast %cst_17 : f32 to vector<16x128xf32>
      %25 = arith.select %23, %19, %24 : vector<16x128xi1>, vector<16x128xf32>
      %cst_18 = arith.constant dense<0xFF800000> : vector<16xf32>
      %26 = vector.multi_reduction <maximumf>, %25, %cst_18 [1] : vector<16x128xf32> to vector<16xf32>
      %27 = vector.shape_cast %26 : vector<16xf32> to vector<16x1xf32>
      %28 = vector.broadcast %27 : vector<16x1xf32> to vector<16x128xf32>
      %29 = arith.subf %25, %28 : vector<16x128xf32>
      %30 = math.exp %29 : vector<16x128xf32>
      %cst_19 = arith.constant dense<0.000000e+00> : vector<16xf32>
      %31 = vector.multi_reduction <add>, %30, %cst_19 [1] : vector<16x128xf32> to vector<16xf32>
      %32 = vector.shape_cast %31 : vector<16xf32> to vector<16x1xf32>
      %33 = math.log %32 : vector<16x1xf32>
      %34 = arith.addf %27, %33 : vector<16x1xf32>
      %35 = vector.broadcast %34 : vector<16x1xf32> to vector<16x128xf32>
      %36 = arith.subf %25, %35 : vector<16x128xf32>
      %c0_20 = arith.constant 0 : index
      %c0_21 = arith.constant 0 : index
      %37 = vector.load %arg6[%c0_20, %c0_21] : memref<16x128xf32, #tpu.memory_space<vmem>>, vector<16x128xf32>
      tpu.vector_store %arg6[%c0_20, %c0_21], %36 {strides = array<i32>} : memref<16x128xf32, #tpu.memory_space<vmem>>, vector<16x128xf32>,
    } else {
    }
    return
  }
  func.func @transform_0(%arg0: i32, %arg1: i32) -> (i32, i32) {
    %c0_i32 = arith.constant 0 : i32
    return %arg0, %arg1 : i32, i32
  }
  func.func @transform_1(%arg0: i32, %arg1: i32) -> (i32, i32) {
    %c0_i32 = arith.constant 0 : i32
    %c0_i32_0 = arith.constant 0 : i32
    %c0_i32_1 = arith.constant 0 : i32
    return %c0_i32, %c0_i32_0 : i32, i32
  }
  func.func @transform_2(%arg0: i32, %arg1: i32) -> (i32, i32) {
    %c0_i32 = arith.constant 0 : i32
    %c0_i32_0 = arith.constant 0 : i32
    return %arg0, %c0_i32 : i32, i32
  }
  func.func @transform_3(%arg0: i32, %arg1: i32) -> (i32, i32) {
    %c0_i32 = arith.constant 0 : i32
    %c0_i32_0 = arith.constant 0 : i32
    return %arg0, %c0_i32 : i32, i32
  }
  func.func @transform_4(%arg0: i32, %arg1: i32) -> (i32, i32) {
    %c0_i32 = arith.constant 0 : i32
    %c0_i32_0 = arith.constant 0 : i32
    return %arg0, %c0_i32 : i32, i32
  }
  func.func @transform_5(%arg0: i32, %arg1: i32) -> (i32, i32) {
    %c0_i32 = arith.constant 0 : i32
    %c0_i32_0 = arith.constant 0 : i32
    return %arg0, %c0_i32 : i32, i32
  }
}

</mosaic_0001>

<llo_original>
// kernel: graphsage2_forward.7
$region0: #{graphsage2_forward.7}
  #allocation0 [shape = 'u32[]', space=smem, size = 0x4, offset = 0x4, fixed_abs, tag = 'smem constant byte address 0x4 - core index']
  #allocation1 [shape = 'u32[144,128]{1,0:T(1,128)}', space=vmem, size = 0x12000, scoped, tag = 'internal scratch']
  #allocation2 [shape = 'f32[16,128]{1,0:T(8,128)}', space=vmem, size = 0x2000, scoped, tag = 'scratch operand']
  %s0 = inlined_call_operand.vmem [shape: bf16[16,16], index: 0, kind: input, shape index: {}]
  %s1 = inlined_call_operand.vmem [shape: bf16[16,128], index: 1, kind: input, shape index: {}]
  %s2 = inlined_call_operand.vmem [shape: f32[16,128], index: 2, kind: input, shape index: {}]
  %s3 = inlined_call_operand.vmem [shape: f32[16,1], index: 3, kind: input, shape index: {}]
  %s4 = inlined_call_operand.vmem [shape: bf16[16,128], index: 4, kind: output, shape index: {0}]
  %s5 = inlined_call_operand.vmem [shape: f32[1,2,128], index: 5, kind: output, shape index: {1}]
  %6 = xla_tuple %s4, %s5
  %s7 = sld [smem:[#allocation0]]
  $region42: #{graphsage2_forward.7} parent=0
    _
  %s9 = ssub.s32 1, %s7
  %s10 = scalar_select 0, %s9, %s7
  // Predicated region
  $region2: #{graphsage2_forward.7} parent=0 // pred_check
    _
  $region3: #{graphsage2_forward.7} parent=0 // pred_check_branch
    %12 = sbr.rel (0) target = $region5
  $region4: #{graphsage2_forward.7} parent=0 // pred_region
    _
  $region5: #{graphsage2_forward.7} parent=0 // pred_fallthru
    _
  // Predicated region
  $region6: #{graphsage2_forward.7} parent=0 // pred_check
    _
  $region7: #{graphsage2_forward.7} parent=0 // pred_check_branch
    %14 = sbr.rel (0) target = $region9
  $region8: #{graphsage2_forward.7} parent=0 // pred_region
    _
  $region9: #{graphsage2_forward.7} parent=0 // pred_fallthru
    _
  // Predicated region
  $region10: #{graphsage2_forward.7} parent=0 // pred_check
    _
  $region11: #{graphsage2_forward.7} parent=0 // pred_check_branch
    %16 = sbr.rel (0) target = $region13
  $region12: #{graphsage2_forward.7} parent=0 // pred_region
    _
  $region13: #{graphsage2_forward.7} parent=0 // pred_fallthru
    _
  // Predicated region
  $region14: #{graphsage2_forward.7} parent=0 // pred_check
    _
  $region15: #{graphsage2_forward.7} parent=0 // pred_check_branch
    %18 = sbr.rel (0) target = $region17
  $region16: #{graphsage2_forward.7} parent=0 // pred_region
    _
  $region17: #{graphsage2_forward.7} parent=0 // pred_fallthru
    _
  %p20 = scmp.eq.s32.totalorder 0, 0
  // Predicated region
  $region18: #{graphsage2_forward.7} parent=0 // pred_check
    %p21 = pneg %p20
  $region19: #{graphsage2_forward.7} parent=0 // pred_check_branch
    %23 = sbr.rel (%p21) target = $region21
  $region20: #{graphsage2_forward.7} parent=0 // pred_region
    %24 = vst [vmem:[#allocation2] sm:$0xff] 0.0
    %25 = vst [vmem:[#allocation2 + $0x8] sm:$0xff] 0.0
  $region21: #{graphsage2_forward.7} parent=0 // pred_fallthru
    _
  %s26 = smul.u32 0, 16
  %s27 = sshra.s32 %s26, 3
  %s28 = sand.u32 %s26, 7
  %s29 = smul.addr %s27, 4
  %s30 = scalar_lea.vmem %s1, %s29
  %v31 = vld [vmem:[%s30] sm:$0xf]
  %v32 = vld [vmem:[%s30 + $0x4] sm:$0xf]
  %v33 = vld [vmem:[#allocation2] sm:$0xff]
  %v34 = vld [vmem:[#allocation2 + $0x8] sm:$0xff]
  %v35 = vld [vmem:[%s0] sm:$0xf]
  %v36 = vld [vmem:[%s0 + $0x4] sm:$0xf]
  %v39 = vunpack.c.l.b16 %v35
  %v40 = vunpack.c.l.b16 %v36
  %v41 = vpack.c.b16 %v40, %v39
  %v44 = vunpack.c.l.b16 %v31
  %v45 = vunpack.c.l.b16 %v32
  %v46 = vpack.c.b16 %v45, %v44
  %vm48 = vcmask 130048
  %v50 = vsel %vm48, %v41, 0
  %52 = vmatprep.subr.bf16.mxu0 0
  %53 = vmatpush1.bf16.msra.mxu0 %v46
  %54 = vmatprep.subr.bf16.mxu0 0
  %55 = vmatpush1.bf16.msra.mxu0 0
  %56 = vmatprep.subr.bf16.mxu0 0
  %57 = vmatpush1.bf16.msra.mxu0 0
  %58 = vmatprep.subr.bf16.mxu0 0
  %59 = vmatpush1.bf16.msra.mxu0 0
  %60 = vmatprep.subr.bf16.mxu0 0
  %61 = vmatpush1.bf16.msra.mxu0 0
  %62 = vmatprep.subr.bf16.mxu0 0
  %63 = vmatpush1.bf16.msra.mxu0 0
  %64 = vmatprep.subr.bf16.mxu0 0
  %65 = vmatpush1.bf16.msra.mxu0 0
  %66 = vmatprep.subr.bf16.mxu0 0
  %67 = vmatpush1.bf16.msra.mxu0 0
  %68 = vmatprep.subr.bf16.mxu0 0
  %69 = vmatpush1.bf16.msra.mxu0 0
  %70 = vmatprep.subr.bf16.mxu0 0
  %71 = vmatpush1.bf16.msra.mxu0 0
  %72 = vmatprep.subr.bf16.mxu0 0
  %73 = vmatpush1.bf16.msra.mxu0 0
  %74 = vmatprep.subr.bf16.mxu0 0
  %75 = vmatpush1.bf16.msra.mxu0 0
  %76 = vmatprep.subr.bf16.mxu0 0
  %77 = vmatpush1.bf16.msra.mxu0 0
  %78 = vmatprep.subr.bf16.mxu0 0
  %79 = vmatpush1.bf16.msra.mxu0 0
  %80 = vmatprep.subr.bf16.mxu0 0
  %81 = vmatpush1.bf16.msra.mxu0 0
  %82 = vmatprep.subr.bf16.mxu0 0
  %83 = vmatpush1.bf16.msra.mxu0 0
  %84 = vmatprep.mubr.bf16.mxu0 0
  %85 = vmatmul.mubr.bf16.gmra.mrb[0].mxu0 %v50
  %v86 = vpop.f32.mrb[0].mxu0
  %v87 = vadd.f32 0.0, %v86
  %v88 = vpop.f32.mrb[0].mxu0
  %v89 = vpop.f32.mrb[0].mxu0
  %v90 = vadd.f32 0.0, %v89
  %v91 = vpop.f32.mrb[0].mxu0
  %92 = vdwg.mxu0
  %v93 = vadd.f32 %v33, %v87
  %v94 = vadd.f32 %v34, %v90
  %95 = vst [vmem:[#allocation2] sm:$0xff] %v93
  %96 = vst [vmem:[#allocation2 + $0x8] sm:$0xff] %v94
  // Predicated region
  $region22: #{graphsage2_forward.7} parent=0 // pred_check
    %p97 = pneg %p20
  $region23: #{graphsage2_forward.7} parent=0 // pred_check_branch
    %99 = sbr.rel (%p97) target = $region25
  $region24: #{graphsage2_forward.7} parent=0 // pred_region
    %v100 = vld [vmem:[%s3] sm:$0xff]
    %v101 = vld [vmem:[%s3 + $0x8] sm:$0xff]
    %v102 = vld [vmem:[#allocation2] sm:$0xff]
    %v103 = vld [vmem:[#allocation2 + $0x8] sm:$0xff]
    %105 = vset.pattern.permute.xlu0 0
    %106 = vperm.xlu0 %105, %v100
    %v107 = vpop.permute.xlu0 %106
    %110 = vset.pattern.permute.xlu0 0
    %111 = vperm.xlu0 %110, %v101
    %v112 = vpop.permute.xlu0 %111
    %v114 = vmul.f32 %v107, %v102
    %v115 = vmul.f32 %v112, %v103
    %v116 = vld [vmem:[%s2] sm:$0xff]
    %v117 = vld [vmem:[%s2 + $0x8] sm:$0xff]
    %v118 = vadd.f32 %v114, %v116
    %v119 = vadd.f32 %v115, %v117
    %v120 = vpack.c.bf16 %v119, %v118
    %v122 = vunpack.c.l.b16 %v120
    %v123 = vunpack.c.h.b16 %v120
    %v124 = vpack.c.b16 %v122, %v122
    %v125 = vpack.c.b16 %v123, %v123
    %128 = vst [vmem:[%s4] sm:$0xf] %v124
    %129 = vst [vmem:[%s4 + $0x4] sm:$0xf] %v125
    %s130 = smul.u32 0, 16
    %v131 = vlaneseq
    %v132 = vshrl.u32 %v131, 7
    %v133 = vadd.s32 %v132, 8
    %v134 = vstv %s130
    %v135 = vadd.s32 %v134, %v132
    %v136 = vadd.s32 %v134, %v133
    %vm137 = vcmp.lt.s32.totalorder %v135, 16
    %vm138 = vcmp.lt.s32.totalorder %v136, 16
    %v139 = vsel %vm137, %v118, 0.0
    %v140 = vsel %vm138, %v119, 0.0
    %v141 = vadd.f32 %v139, %v140
    %v142 = vrot.slane %v141, 4
    %v143 = vadd.f32 %v141, %v142
    %v144 = vrot.slane %v143, 2
    %v145 = vadd.f32 %v143, %v144
    %v146 = vrot.slane %v145, 1
    %v147 = vadd.f32 %v145, %v146
    %148 = vst [vmem:[%s5] sm:$0x1] %v147
    %v149 = vmul.f32 %v139, %v139
    %v150 = vmul.f32 %v140, %v140
    %v151 = vadd.f32 %v149, %v150
    %v152 = vrot.slane %v151, 4
    %v153 = vadd.f32 %v151, %v152
    %v154 = vrot.slane %v153, 2
    %v155 = vadd.f32 %v153, %v154
    %v156 = vrot.slane %v155, 1
    %v157 = vadd.f32 %v155, %v156
    %158 = vst [vmem:[%s5 + $0x1] sm:$0x1] %v157
  $region25: #{graphsage2_forward.7} parent=0 // pred_fallthru
    _
  // Predicated region
  $region26: #{graphsage2_forward.7} parent=0 // pred_check
    _
  $region27: #{graphsage2_forward.7} parent=0 // pred_check_branch
    %160 = sbr.rel (0) target = $region29
  $region28: #{graphsage2_forward.7} parent=0 // pred_region
    _
  $region29: #{graphsage2_forward.7} parent=0 // pred_fallthru
    _
  // Predicated region
  $region30: #{graphsage2_forward.7} parent=0 // pred_check
    _
  $region31: #{graphsage2_forward.7} parent=0 // pred_check_branch
    %162 = sbr.rel (0) target = $region33
  $region32: #{graphsage2_forward.7} parent=0 // pred_region
    _
  $region33: #{graphsage2_forward.7} parent=0 // pred_fallthru
    _
  // Predicated region
  $region34: #{graphsage2_forward.7} parent=0 // pred_check
    _
  $region35: #{graphsage2_forward.7} parent=0 // pred_check_branch
    %164 = sbr.rel (0) target = $region37
  $region36: #{graphsage2_forward.7} parent=0 // pred_region
    _
  $region37: #{graphsage2_forward.7} parent=0 // pred_fallthru
    _
  // Predicated region
  $region38: #{graphsage2_forward.7} parent=0 // pred_check
    _
  $region39: #{graphsage2_forward.7} parent=0 // pred_check_branch
    %166 = sbr.rel (0) target = $region41
  $region40: #{graphsage2_forward.7} parent=0 // pred_region
    _
  $region41: #{graphsage2_forward.7} parent=0 // pred_fallthru
    _

// kernel: graphsage2_forward.6
$region0: #{graphsage2_forward.6}
  #allocation0 [shape = 'u32[]', space=smem, size = 0x4, offset = 0x4, fixed_abs, tag = 'smem constant byte address 0x4 - core index']
  #allocation1 [shape = 'u32[144,128]{1,0:T(1,128)}', space=vmem, size = 0x12000, scoped, tag = 'internal scratch']
  %s0 = inlined_call_operand.vmem [shape: bf16[16,128], index: 0, kind: input, shape index: {}]
  %s1 = inlined_call_operand.vmem [shape: f32[1,128], index: 1, kind: input, shape index: {}]
  %s2 = inlined_call_operand.vmem [shape: f32[1,128], index: 2, kind: input, shape index: {}]
  %s3 = inlined_call_operand.vmem [shape: bf16[128,256], index: 3, kind: input, shape index: {}]
  %s4 = inlined_call_operand.vmem [shape: f32[1,128], index: 4, kind: input, shape index: {}]
  %s5 = inlined_call_operand.vmem [shape: bf16[16,128], index: 5, kind: output, shape index: {0}]
  %s6 = inlined_call_operand.vmem [shape: f32[16,128], index: 6, kind: output, shape index: {1}]
  %7 = xla_tuple %s5, %s6
  %s8 = sld [smem:[#allocation0]]
  $region38: #{graphsage2_forward.6} parent=0
    _
  %s10 = ssub.s32 1, %s8
  %s11 = scalar_select 0, %s10, %s8
  // Predicated region
  $region2: #{graphsage2_forward.6} parent=0 // pred_check
    _
  $region3: #{graphsage2_forward.6} parent=0 // pred_check_branch
    %13 = sbr.rel (0) target = $region5
  $region4: #{graphsage2_forward.6} parent=0 // pred_region
    _
  $region5: #{graphsage2_forward.6} parent=0 // pred_fallthru
    _
  // Predicated region
  $region6: #{graphsage2_forward.6} parent=0 // pred_check
    _
  $region7: #{graphsage2_forward.6} parent=0 // pred_check_branch
    %15 = sbr.rel (0) target = $region9
  $region8: #{graphsage2_forward.6} parent=0 // pred_region
    _
  $region9: #{graphsage2_forward.6} parent=0 // pred_fallthru
    _
  // Predicated region
  $region10: #{graphsage2_forward.6} parent=0 // pred_check
    _
  $region11: #{graphsage2_forward.6} parent=0 // pred_check_branch
    %17 = sbr.rel (0) target = $region13
  $region12: #{graphsage2_forward.6} parent=0 // pred_region
    _
  $region13: #{graphsage2_forward.6} parent=0 // pred_fallthru
    _
  // Predicated region
  $region14: #{graphsage2_forward.6} parent=0 // pred_check
    _
  $region15: #{graphsage2_forward.6} parent=0 // pred_check_branch
    %19 = sbr.rel (0) target = $region17
  $region16: #{graphsage2_forward.6} parent=0 // pred_region
    _
  $region17: #{graphsage2_forward.6} parent=0 // pred_fallthru
    _
  // Predicated region
  $region18: #{graphsage2_forward.6} parent=0 // pred_check
    _
  $region19: #{graphsage2_forward.6} parent=0 // pred_check_branch
    %21 = sbr.rel (0) target = $region21
  $region20: #{graphsage2_forward.6} parent=0 // pred_region
    _
  $region21: #{graphsage2_forward.6} parent=0 // pred_fallthru
    _
  %v23 = vld [vmem:[%s0] sm:$0xf]
  %v24 = vld [vmem:[%s0 + $0x4] sm:$0xf]
  %v25 = vunpack.c.l.bf16 %v23
  %v26 = vunpack.c.l.bf16 %v24
  %v27 = vld [vmem:[%s1] sm:$0x1]
  %v29 = vlaneseq
  %v30 = vshrl.u32 %v29, 7
  %v31 = vsub.s32 0, %v30
  %v32 = vrot.slane %v27, %v31
  %v34 = vmul.f32 %v25, %v32
  %v35 = vmul.f32 %v26, %v32
  %v36 = vld [vmem:[%s2] sm:$0x1]
  %v38 = vlaneseq
  %v39 = vshrl.u32 %v38, 7
  %v40 = vsub.s32 0, %v39
  %v41 = vrot.slane %v36, %v40
  %v43 = vadd.f32 %v34, %v41
  %v44 = vadd.f32 %v35, %v41
  %v45 = vpack.c.bf16 %v44, %v43
  %v46 = vld [vmem:[%s3] sm:$0xff]
  %v47 = vld [vmem:[%s3 + $0x8] sm:$0xff]
  %v48 = vld [vmem:[%s3 + $0x10] sm:$0xff]
  %v49 = vld [vmem:[%s3 + $0x18] sm:$0xff]
  %v50 = vld [vmem:[%s3 + $0x20] sm:$0xff]
  %v51 = vld [vmem:[%s3 + $0x28] sm:$0xff]
  %v52 = vld [vmem:[%s3 + $0x30] sm:$0xff]
  %v53 = vld [vmem:[%s3 + $0x38] sm:$0xff]
  %v54 = vld [vmem:[%s3 + $0x40] sm:$0xff]
  %v55 = vld [vmem:[%s3 + $0x48] sm:$0xff]
  %v56 = vld [vmem:[%s3 + $0x50] sm:$0xff]
  %v57 = vld [vmem:[%s3 + $0x58] sm:$0xff]
  %v58 = vld [vmem:[%s3 + $0x60] sm:$0xff]
  %v59 = vld [vmem:[%s3 + $0x68] sm:$0xff]
  %v60 = vld [vmem:[%s3 + $0x70] sm:$0xff]
  %v61 = vld [vmem:[%s3 + $0x78] sm:$0xff]
  %v78 = vunpack.c.l.b16 %v46
  %v79 = vunpack.c.h.b16 %v46
  %v80 = vunpack.c.l.b16 %v47
  %v81 = vunpack.c.h.b16 %v47
  %v82 = vunpack.c.l.b16 %v48
  %v83 = vunpack.c.h.b16 %v48
  %v84 = vunpack.c.l.b16 %v49
  %v85 = vunpack.c.h.b16 %v49
  %v86 = vunpack.c.l.b16 %v50
  %v87 = vunpack.c.h.b16 %v50
  %v88 = vunpack.c.l.b16 %v51
  %v89 = vunpack.c.h.b16 %v51
  %v90 = vunpack.c.l.b16 %v52
  %v91 = vunpack.c.h.b16 %v52
  %v92 = vunpack.c.l.b16 %v53
  %v93 = vunpack.c.h.b16 %v53
  %v94 = vunpack.c.l.b16 %v54
  %v95 = vunpack.c.h.b16 %v54
  %v96 = vunpack.c.l.b16 %v55
  %v97 = vunpack.c.h.b16 %v55
  %v98 = vunpack.c.l.b16 %v56
  %v99 = vunpack.c.h.b16 %v56
  %v100 = vunpack.c.l.b16 %v57
  %v101 = vunpack.c.h.b16 %v57
  %v102 = vunpack.c.l.b16 %v58
  %v103 = vunpack.c.h.b16 %v58
  %v104 = vunpack.c.l.b16 %v59
  %v105 = vunpack.c.h.b16 %v59
  %v106 = vunpack.c.l.b16 %v60
  %v107 = vunpack.c.h.b16 %v60
  %v108 = vunpack.c.l.b16 %v61
  %v109 = vunpack.c.h.b16 %v61
  %v110 = vpack.c.b16 %v80, %v78
  %v111 = vpack.c.b16 %v81, %v79
  %v112 = vpack.c.b16 %v84, %v82
  %v113 = vpack.c.b16 %v85, %v83
  %v114 = vpack.c.b16 %v88, %v86
  %v115 = vpack.c.b16 %v89, %v87
  %v116 = vpack.c.b16 %v92, %v90
  %v117 = vpack.c.b16 %v93, %v91
  %v118 = vpack.c.b16 %v96, %v94
  %v119 = vpack.c.b16 %v97, %v95
  %v120 = vpack.c.b16 %v100, %v98
  %v121 = vpack.c.b16 %v101, %v99
  %v122 = vpack.c.b16 %v104, %v102
  %v123 = vpack.c.b16 %v105, %v103
  %v124 = vpack.c.b16 %v108, %v106
  %v125 = vpack.c.b16 %v109, %v107
  %142 = vmatprep.subr.bf16.mxu0 %v111
  %143 = vmatpush1.bf16.msra.mxu0 %v110
  %144 = vmatprep.subr.bf16.mxu0 %v113
  %145 = vmatpush1.bf16.msra.mxu0 %v112
  %146 = vmatprep.subr.bf16.mxu0 %v115
  %147 = vmatpush1.bf16.msra.mxu0 %v114
  %148 = vmatprep.subr.bf16.mxu0 %v117
  %149 = vmatpush1.bf16.msra.mxu0 %v116
  %150 = vmatprep.subr.bf16.mxu0 %v119
  %151 = vmatpush1.bf16.msra.mxu0 %v118
  %152 = vmatprep.subr.bf16.mxu0 %v121
  %153 = vmatpush1.bf16.msra.mxu0 %v120
  %154 = vmatprep.subr.bf16.mxu0 %v123
  %155 = vmatpush1.bf16.msra.mxu0 %v122
  %156 = vmatprep.subr.bf16.mxu0 %v125
  %157 = vmatpush1.bf16.msra.mxu0 %v124
  %158 = vmatprep.subr.bf16.mxu0 0
  %159 = vmatpush1.bf16.msra.mxu0 0
  %160 = vmatprep.subr.bf16.mxu0 0
  %161 = vmatpush1.bf16.msra.mxu0 0
  %162 = vmatprep.subr.bf16.mxu0 0
  %163 = vmatpush1.bf16.msra.mxu0 0
  %164 = vmatprep.subr.bf16.mxu0 0
  %165 = vmatpush1.bf16.msra.mxu0 0
  %166 = vmatprep.subr.bf16.mxu0 0
  %167 = vmatpush1.bf16.msra.mxu0 0
  %168 = vmatprep.subr.bf16.mxu0 0
  %169 = vmatpush1.bf16.msra.mxu0 0
  %170 = vmatprep.subr.bf16.mxu0 0
  %171 = vmatpush1.bf16.msra.mxu0 0
  %172 = vmatprep.subr.bf16.mxu0 0
  %173 = vmatpush1.bf16.msra.mxu0 0
  %174 = vmatprep.mubr.bf16.mxu0 0
  %175 = vmatmul.mubr.bf16.gmra.mrb[0].mxu0 %v45
  %v176 = vpop.f32.mrb[0].mxu0
  %v177 = vadd.f32 0.0, %v176
  %v178 = vpop.f32.mrb[0].mxu0
  %v179 = vadd.f32 0.0, %v178
  %v180 = vpop.f32.mrb[0].mxu0
  %v181 = vadd.f32 0.0, %v180
  %v182 = vpop.f32.mrb[0].mxu0
  %v183 = vadd.f32 0.0, %v182
  %184 = vdwg.mxu0
  %v185 = vpack.c.bf16 %v181, %v177
  %v187 = vunpack.c.l.b16 %v185
  %v188 = vunpack.c.h.b16 %v185
  %v189 = vpack.c.b16 %v187, %v187
  %v190 = vpack.c.b16 %v188, %v188
  %193 = vst [vmem:[%s5] sm:$0xf] %v189
  %194 = vst [vmem:[%s5 + $0x4] sm:$0xf] %v190
  %v195 = vld [vmem:[%s4] sm:$0x1]
  %v197 = vlaneseq
  %v198 = vshrl.u32 %v197, 7
  %v199 = vsub.s32 0, %v198
  %v200 = vrot.slane %v195, %v199
  %v202 = vadd.f32 %v179, %v200
  %v203 = vadd.f32 %v183, %v200
  %204 = vst [vmem:[%s6] sm:$0xff] %v202
  %205 = vst [vmem:[%s6 + $0x8] sm:$0xff] %v203
  // Predicated region
  $region22: #{graphsage2_forward.6} parent=0 // pred_check
    _
  $region23: #{graphsage2_forward.6} parent=0 // pred_check_branch
    %207 = sbr.rel (0) target = $region25
  $region24: #{graphsage2_forward.6} parent=0 // pred_region
    _
  $region25: #{graphsage2_forward.6} parent=0 // pred_fallthru
    _
  // Predicated region
  $region26: #{graphsage2_forward.6} parent=0 // pred_check
    _
  $region27: #{graphsage2_forward.6} parent=0 // pred_check_branch
    %209 = sbr.rel (0) target = $region29
  $region28: #{graphsage2_forward.6} parent=0 // pred_region
    _
  $region29: #{graphsage2_forward.6} parent=0 // pred_fallthru
    _
  // Predicated region
  $region30: #{graphsage2_forward.6} parent=0 // pred_check
    _
  $region31: #{graphsage2_forward.6} parent=0 // pred_check_branch
    %211 = sbr.rel (0) target = $region33
  $region32: #{graphsage2_forward.6} parent=0 // pred_region
    _
  $region33: #{graphsage2_forward.6} parent=0 // pred_fallthru
    _
  // Predicated region
  $region34: #{graphsage2_forward.6} parent=0 // pred_check
    _
  $region35: #{graphsage2_forward.6} parent=0 // pred_check_branch
    %213 = sbr.rel (0) target = $region37
  $region36: #{graphsage2_forward.6} parent=0 // pred_region
    _
  $region37: #{graphsage2_forward.6} parent=0 // pred_fallthru
    _

// kernel: graphsage2_forward.11
$region0: #{graphsage2_forward.11}
  #allocation0 [shape = 'u32[]', space=smem, size = 0x4, offset = 0x4, fixed_abs, tag = 'smem constant byte address 0x4 - core index']
  #allocation1 [shape = 'u32[144,128]{1,0:T(1,128)}', space=vmem, size = 0x12000, scoped, tag = 'internal scratch']
  %s0 = inlined_call_operand.vmem [shape: bf16[16,16], index: 0, kind: input, shape index: {}]
  %s1 = inlined_call_operand.vmem [shape: bf16[16,128], index: 1, kind: input, shape index: {}]
  %s2 = inlined_call_operand.vmem [shape: f32[16,128], index: 2, kind: input, shape index: {}]
  %s3 = inlined_call_operand.vmem [shape: f32[16,1], index: 3, kind: input, shape index: {}]
  %s4 = inlined_call_operand.vmem [shape: f32[16,128], index: 4, kind: output, shape index: {0}]
  %s5 = inlined_call_operand.vmem [shape: f32[16,128], index: 5, kind: output, shape index: {1}]
  %6 = xla_tuple %s4, %s5
  %s7 = sld [smem:[#allocation0]]
  $region42: #{graphsage2_forward.11} parent=0
    _
  %s9 = ssub.s32 1, %s7
  %s10 = scalar_select 0, %s9, %s7
  // Predicated region
  $region2: #{graphsage2_forward.11} parent=0 // pred_check
    _
  $region3: #{graphsage2_forward.11} parent=0 // pred_check_branch
    %12 = sbr.rel (0) target = $region5
  $region4: #{graphsage2_forward.11} parent=0 // pred_region
    _
  $region5: #{graphsage2_forward.11} parent=0 // pred_fallthru
    _
  // Predicated region
  $region6: #{graphsage2_forward.11} parent=0 // pred_check
    _
  $region7: #{graphsage2_forward.11} parent=0 // pred_check_branch
    %14 = sbr.rel (0) target = $region9
  $region8: #{graphsage2_forward.11} parent=0 // pred_region
    _
  $region9: #{graphsage2_forward.11} parent=0 // pred_fallthru
    _
  // Predicated region
  $region10: #{graphsage2_forward.11} parent=0 // pred_check
    _
  $region11: #{graphsage2_forward.11} parent=0 // pred_check_branch
    %16 = sbr.rel (0) target = $region13
  $region12: #{graphsage2_forward.11} parent=0 // pred_region
    _
  $region13: #{graphsage2_forward.11} parent=0 // pred_fallthru
    _
  // Predicated region
  $region14: #{graphsage2_forward.11} parent=0 // pred_check
    _
  $region15: #{graphsage2_forward.11} parent=0 // pred_check_branch
    %18 = sbr.rel (0) target = $region17
  $region16: #{graphsage2_forward.11} parent=0 // pred_region
    _
  $region17: #{graphsage2_forward.11} parent=0 // pred_fallthru
    _
  %p20 = scmp.eq.s32.totalorder 0, 0
  // Predicated region
  $region18: #{graphsage2_forward.11} parent=0 // pred_check
    %p21 = pneg %p20
  $region19: #{graphsage2_forward.11} parent=0 // pred_check_branch
    %23 = sbr.rel (%p21) target = $region21
  $region20: #{graphsage2_forward.11} parent=0 // pred_region
    %24 = vst [vmem:[%s5] sm:$0xff] 0.0
    %25 = vst [vmem:[%s5 + $0x8] sm:$0xff] 0.0
  $region21: #{graphsage2_forward.11} parent=0 // pred_fallthru
    _
  %s26 = smul.u32 0, 16
  %s27 = sshra.s32 %s26, 3
  %s28 = sand.u32 %s26, 7
  %s29 = smul.addr %s27, 4
  %s30 = scalar_lea.vmem %s1, %s29
  %v31 = vld [vmem:[%s30] sm:$0xf]
  %v32 = vld [vmem:[%s30 + $0x4] sm:$0xf]
  %v33 = vld [vmem:[%s5] sm:$0xff]
  %v34 = vld [vmem:[%s5 + $0x8] sm:$0xff]
  %v35 = vld [vmem:[%s0] sm:$0xf]
  %v36 = vld [vmem:[%s0 + $0x4] sm:$0xf]
  %v39 = vunpack.c.l.b16 %v35
  %v40 = vunpack.c.l.b16 %v36
  %v41 = vpack.c.b16 %v40, %v39
  %v44 = vunpack.c.l.b16 %v31
  %v45 = vunpack.c.l.b16 %v32
  %v46 = vpack.c.b16 %v45, %v44
  %vm48 = vcmask 130048
  %v50 = vsel %vm48, %v41, 0
  %52 = vmatprep.subr.bf16.mxu0 0
  %53 = vmatpush1.bf16.msra.mxu0 %v46
  %54 = vmatprep.subr.bf16.mxu0 0
  %55 = vmatpush1.bf16.msra.mxu0 0
  %56 = vmatprep.subr.bf16.mxu0 0
  %57 = vmatpush1.bf16.msra.mxu0 0
  %58 = vmatprep.subr.bf16.mxu0 0
  %59 = vmatpush1.bf16.msra.mxu0 0
  %60 = vmatprep.subr.bf16.mxu0 0
  %61 = vmatpush1.bf16.msra.mxu0 0
  %62 = vmatprep.subr.bf16.mxu0 0
  %63 = vmatpush1.bf16.msra.mxu0 0
  %64 = vmatprep.subr.bf16.mxu0 0
  %65 = vmatpush1.bf16.msra.mxu0 0
  %66 = vmatprep.subr.bf16.mxu0 0
  %67 = vmatpush1.bf16.msra.mxu0 0
  %68 = vmatprep.subr.bf16.mxu0 0
  %69 = vmatpush1.bf16.msra.mxu0 0
  %70 = vmatprep.subr.bf16.mxu0 0
  %71 = vmatpush1.bf16.msra.mxu0 0
  %72 = vmatprep.subr.bf16.mxu0 0
  %73 = vmatpush1.bf16.msra.mxu0 0
  %74 = vmatprep.subr.bf16.mxu0 0
  %75 = vmatpush1.bf16.msra.mxu0 0
  %76 = vmatprep.subr.bf16.mxu0 0
  %77 = vmatpush1.bf16.msra.mxu0 0
  %78 = vmatprep.subr.bf16.mxu0 0
  %79 = vmatpush1.bf16.msra.mxu0 0
  %80 = vmatprep.subr.bf16.mxu0 0
  %81 = vmatpush1.bf16.msra.mxu0 0
  %82 = vmatprep.subr.bf16.mxu0 0
  %83 = vmatpush1.bf16.msra.mxu0 0
  %84 = vmatprep.mubr.bf16.mxu0 0
  %85 = vmatmul.mubr.bf16.gmra.mrb[0].mxu0 %v50
  %v86 = vpop.f32.mrb[0].mxu0
  %v87 = vadd.f32 0.0, %v86
  %v88 = vpop.f32.mrb[0].mxu0
  %v89 = vpop.f32.mrb[0].mxu0
  %v90 = vadd.f32 0.0, %v89
  %v91 = vpop.f32.mrb[0].mxu0
  %92 = vdwg.mxu0
  %v93 = vadd.f32 %v33, %v87
  %v94 = vadd.f32 %v34, %v90
  %95 = vst [vmem:[%s5] sm:$0xff] %v93
  %96 = vst [vmem:[%s5 + $0x8] sm:$0xff] %v94
  // Predicated region
  $region22: #{graphsage2_forward.11} parent=0 // pred_check
    %p97 = pneg %p20
  $region23: #{graphsage2_forward.11} parent=0 // pred_check_branch
    %99 = sbr.rel (%p97) target = $region25
  $region24: #{graphsage2_forward.11} parent=0 // pred_region
    %v100 = vld [vmem:[%s3] sm:$0xff]
    %v101 = vld [vmem:[%s3 + $0x8] sm:$0xff]
    %v102 = vld [vmem:[%s5] sm:$0xff]
    %v103 = vld [vmem:[%s5 + $0x8] sm:$0xff]
    %105 = vset.pattern.permute.xlu0 0
    %106 = vperm.xlu0 %105, %v100
    %v107 = vpop.permute.xlu0 %106
    %110 = vset.pattern.permute.xlu0 0
    %111 = vperm.xlu0 %110, %v101
    %v112 = vpop.permute.xlu0 %111
    %v114 = vmul.f32 %v107, %v102
    %v115 = vmul.f32 %v112, %v103
    %v116 = vld [vmem:[%s2] sm:$0xff]
    %v117 = vld [vmem:[%s2 + $0x8] sm:$0xff]
    %v118 = vadd.f32 %v114, %v116
    %v119 = vadd.f32 %v115, %v117
    %120 = vst [vmem:[%s5] sm:$0xff] %v118
    %121 = vst [vmem:[%s5 + $0x8] sm:$0xff] %v119
    %v122 = vlaneseq
    %v123 = vand.u32 %v122, 127
    %vm124 = vcmp.lt.s32.totalorder %v123, 4
    %v125 = vsel %vm124, %v118, -1e+30
    %v126 = vsel %vm124, %v119, -1e+30
    %127 = vmax.xlane.f32.xlu0 %v125
    %v128 = vpop.xlane.xlu0 %127
    %129 = vmax.xlane.f32.xlu0 %v126
    %v130 = vpop.xlane.xlu0 %129
    %v131 = vsub.f32 %v125, %v128
    %v132 = vsub.f32 %v126, %v130
    %v133 = vmul.f32 %v131, 1.442695
    %v134 = vpow.pop %v133
    %v135 = vmul.f32 %v132, 1.442695
    %v136 = vpow.pop %v135
    %137 = vadd.xlane.f32.xlu0 %v134
    %v138 = vpop.xlane.xlu0 %137
    %139 = vadd.xlane.f32.xlu0 %v136
    %v140 = vpop.xlane.xlu0 %139
    %v141 = vlog2.pop %v138
    %v142 = vmul.f32 %v141, 0.6931472
    %v143 = vlog2.pop %v140
    %v144 = vmul.f32 %v143, 0.6931472
    %v145 = vadd.f32 %v128, %v142
    %v146 = vadd.f32 %v130, %v144
    %v147 = vsub.f32 %v125, %v145
    %v148 = vsub.f32 %v126, %v146
    %149 = vst [vmem:[%s4] sm:$0xff] %v147
    %150 = vst [vmem:[%s4 + $0x8] sm:$0xff] %v148
  $region25: #{graphsage2_forward.11} parent=0 // pred_fallthru
    _
  // Predicated region
  $region26: #{graphsage2_forward.11} parent=0 // pred_check
    _
  $region27: #{graphsage2_forward.11} parent=0 // pred_check_branch
    %152 = sbr.rel (0) target = $region29
  $region28: #{graphsage2_forward.11} parent=0 // pred_region
    _
  $region29: #{graphsage2_forward.11} parent=0 // pred_fallthru
    _
  // Predicated region
  $region30: #{graphsage2_forward.11} parent=0 // pred_check
    _
  $region31: #{graphsage2_forward.11} parent=0 // pred_check_branch
    %154 = sbr.rel (0) target = $region33
  $region32: #{graphsage2_forward.11} parent=0 // pred_region
    _
  $region33: #{graphsage2_forward.11} parent=0 // pred_fallthru
    _
  // Predicated region
  $region34: #{graphsage2_forward.11} parent=0 // pred_check
    _
  $region35: #{graphsage2_forward.11} parent=0 // pred_check_branch
    %156 = sbr.rel (0) target = $region37
  $region36: #{graphsage2_forward.11} parent=0 // pred_region
    _
  $region37: #{graphsage2_forward.11} parent=0 // pred_fallthru
    _
  // Predicated region
  $region38: #{graphsage2_forward.11} parent=0 // pred_check
    _
  $region39: #{graphsage2_forward.11} parent=0 // pred_check_branch
    %158 = sbr.rel (0) target = $region41
  $region40: #{graphsage2_forward.11} parent=0 // pred_region
    _
  $region41: #{graphsage2_forward.11} parent=0 // pred_fallthru
    _

</llo_original>
